<compile_context>
chip_gen: v5e
topology: v5e:2x2
jax: 0.10.0
libtpu: 0.0.40
codegen_flags: <defaults>
</compile_context>

<pallas_src>
import functools
from typing import List, Tuple

import jax
import jax.numpy as jnp
from jax.experimental import pallas as pl
from jax.experimental.pallas import tpu as pltpu

_LANE = 128  # TPU lane width; feature dims padded to multiples of this.


def _round_up(x: int, m: int) -> int:
    return ((x + m - 1) // m) * m


def _cdiv(a: int, b: int) -> int:
    return (a + b - 1) // b


# --------------------------------------------------------------------------- #
# Kernel                                                                       #
# --------------------------------------------------------------------------- #
def _mlp_kernel(x_ref, *refs, num_layers: int, compute_dtype):
    """Fused MLP body: o = (tanh(...tanh(x@W1+b1)...)) @ Wn + bn."""
    o_ref = refs[-1]
    h = x_ref[...]                                 # (tm, in_pad), compute_dtype
    for i in range(num_layers):
        w_ref = refs[2 * i]                        # (prev_pad, out_pad), compute_dtype
        b_ref = refs[2 * i + 1]                    # (1, out_pad), f32
        # MXU matmul with f32 accumulation; bias add in f32 on the VPU.
        y = jnp.dot(h, w_ref[...], preferred_element_type=jnp.float32) + b_ref[...]
        if i < num_layers - 1:
            # f32 tanh (safe on v5e's f32-only EUP), then carry the activation
            # in compute_dtype: halves vreg footprint and feeds the next dot
            # without an extra cast. (tanh(0)=0 keeps padded lanes zero.)
            h = jnp.tanh(y).astype(compute_dtype)
        else:
            h = y
    o_ref[...] = h.astype(o_ref.dtype)


# --------------------------------------------------------------------------- #
# Param preparation (runs ONCE, outside the per-call jitted path)              #
# --------------------------------------------------------------------------- #
def prepare_mlp_params(params, compute_dtype=jnp.bfloat16):
    """Pad weights/biases to lane-dense shapes and cast weights to compute_dtype.

    params: list of (W:(in,out) f32, b:(1,out) f32).
    Returns a tuple of (W_padded:(in_pad,out_pad) compute_dtype,
                        b_padded:(1,out_pad) f32).
    """
    in_features = params[0][0].shape[0]
    prev_pad = _round_up(in_features, _LANE)
    padded: List[Tuple[jax.Array, jax.Array]] = []
    for (w, b) in params:
        fi, fo = w.shape
        fo_pad = _round_up(fo, _LANE)
        w_p = jnp.zeros((prev_pad, fo_pad), compute_dtype).at[:fi, :fo].set(
            w.astype(compute_dtype))
        b_p = jnp.zeros((1, fo_pad), jnp.float32).at[:, :fo].set(
            jnp.reshape(b, (1, -1)).astype(jnp.float32))
        padded.append((w_p, b_p))
        prev_pad = fo_pad
    return tuple(padded)


# --------------------------------------------------------------------------- #
# Forward                                                                      #
# --------------------------------------------------------------------------- #
@functools.partial(jax.jit, static_argnames=("out_features", "tm_max"))
def mlp_forward(padded_params, x: jax.Array, *, out_features: int,
                tm_max: int = 512) -> jax.Array:
    """padded_params: output of prepare_mlp_params; x: (B, in). Returns (B, out)."""
    B, in_features = x.shape
    num_layers = len(padded_params)
    compute_dtype = padded_params[0][0].dtype
    in_pad = padded_params[0][0].shape[0]
    out_pad = padded_params[-1][0].shape[1]
    cd_size = jnp.dtype(compute_dtype).itemsize

    # Output in compute_dtype on the bf16 path (halves writeback), f32 otherwise.
    out_dtype = compute_dtype if cd_size == 2 else jnp.float32
    out_size = jnp.dtype(out_dtype).itemsize

    # ---- batch tiling: balanced tiles, native sublane multiple, >=2 tiles ----
    sublane = 16 if cd_size == 2 else 8          # bf16 packs 2 rows per sublane
    n_tiles = max(_cdiv(B, tm_max), 2 if B >= 2 * sublane else 1)
    tm = _round_up(_cdiv(B, n_tiles), sublane)
    b_pad = _round_up(B, tm)
    grid = (b_pad // tm,)

    # Pad the activation only (weights were padded once in prepare_mlp_params).
    x_p = jnp.zeros((b_pad, in_pad), compute_dtype).at[:B, :in_features].set(
        x.astype(compute_dtype))

    in_specs = [pl.BlockSpec((tm, in_pad), lambda i: (i, 0))]
    flat_inputs: List[jax.Array] = [x_p]
    for (w_p, b_p) in padded_params:
        # Same block every grid step -> weights/biases stay resident in VMEM.
        in_specs.append(pl.BlockSpec(w_p.shape, lambda i: (0, 0)))
        in_specs.append(pl.BlockSpec(b_p.shape, lambda i: (0, 0)))
        flat_inputs.append(w_p)
        flat_inputs.append(b_p)

    # ---- cost estimate + VMEM budget (advisory) ----
    weight_bytes = sum(int(w.size) * w.dtype.itemsize + int(b.size) * b.dtype.itemsize
                       for (w, b) in padded_params)
    flops = 2 * b_pad * sum(int(w.shape[0]) * int(w.shape[1])
                            for (w, _) in padded_params)
    transcendentals = b_pad * sum(int(w.shape[1]) for (w, _) in padded_params[:-1])
    bytes_accessed = b_pad * in_pad * cd_size + b_pad * out_pad * out_size + weight_bytes
    cost = pl.CostEstimate(flops=flops, transcendentals=transcendentals,
                           bytes_accessed=bytes_accessed)
    # Resident weights + double-buffered in/out tiles, with headroom; keep the
    # cap below v7x's 64 MiB physical VMEM.
    io_bytes = 2 * tm * (in_pad * cd_size + out_pad * out_size)
    vmem_limit = min(56 << 20, max(32 << 20, 2 * (weight_bytes + io_bytes) + (1 << 20)))

    kernel = functools.partial(_mlp_kernel, num_layers=num_layers,
                               compute_dtype=compute_dtype)
    out = pl.pallas_call(
        kernel,
        out_shape=jax.ShapeDtypeStruct((b_pad, out_pad), out_dtype),
        grid=grid,
        in_specs=in_specs,
        out_specs=pl.BlockSpec((tm, out_pad), lambda i: (i, 0)),
        compiler_params=pltpu.CompilerParams(
            dimension_semantics=("parallel",),   # shard batch tiles across TCs (v7x)
            vmem_limit_bytes=int(vmem_limit),
        ),
        cost_estimate=cost,
    )(*flat_inputs)

    return out[:B, :out_features].astype(x.dtype)


# --------------------------------------------------------------------------- #
# Init / reference                                                             #
# --------------------------------------------------------------------------- #
def init_mlp_params(key: jax.Array, sizes: Tuple[int, ...], bias: bool = True):
    """Deterministic init mimicking nn.Linear's U(-1/sqrt(in), 1/sqrt(in))."""
    params = []
    for i in range(len(sizes) - 1):
        fan_in, fan_out = sizes[i], sizes[i + 1]
        key, kw, kb = jax.random.split(key, 3)
        bound = 1.0 / jnp.sqrt(jnp.float32(fan_in))
        # stored as (in, out): transpose of PyTorch's (out, in) weight
        w = jax.random.uniform(kw, (fan_in, fan_out), jnp.float32, -bound, bound)
        if bias:
            b = jax.random.uniform(kb, (1, fan_out), jnp.float32, -bound, bound)
        else:
            b = jnp.zeros((1, fan_out), jnp.float32)
        params.append((w, b))
    return params


def mlp_reference(params, x: jax.Array) -> jax.Array:
    n = len(params)
    for i, (w, b) in enumerate(params):
        x = x @ w + b
        if i < n - 1:
            x = jnp.tanh(x)
    return x


if __name__ == "__main__":
    key = jax.random.PRNGKey(0)
    sizes = (32, 64, 64, 16)  # MLP(sizes): Linear(32,64) Tanh Linear(64,64) Tanh Linear(64,16)
    batch = 8

    key, kx, kp = jax.random.split(key, 3)
    x = jax.random.normal(kx, (batch, sizes[0]), jnp.float32)
    params = init_mlp_params(kp, sizes, bias=True)
    ref = mlp_reference(params, x)

    # f32 compute path: tight correctness check vs pure-JAX reference.
    pp_f32 = prepare_mlp_params(params, compute_dtype=jnp.float32)
    out_f32 = jax.block_until_ready(mlp_forward(pp_f32, x, out_features=sizes[-1]))
    assert out_f32.shape == (batch, sizes[-1])
    assert jnp.allclose(out_f32, ref, atol=1e-5, rtol=1e-5), "f32 kernel mismatch vs reference"

    # bf16 MXU-operand path (default; valid on v5e/v6e/v7x): loose check.
    pp_bf16 = prepare_mlp_params(params, compute_dtype=jnp.bfloat16)
    out_bf16 = jax.block_until_ready(mlp_forward(pp_bf16, x, out_features=sizes[-1]))
    assert out_bf16.shape == (batch, sizes[-1])
    assert jnp.allclose(out_bf16, ref, atol=1e-1, rtol=1e-1), "bf16 kernel mismatch vs reference"

    # Non-multiple batch: exercises balanced tiling (tm=152 -> b_pad=304, 2 tiles).
    xb = jax.random.normal(kx, (300, sizes[0]), jnp.float32)
    refb = mlp_reference(params, xb)
    outb = jax.block_until_ready(
        mlp_forward(pp_f32, xb, out_features=sizes[-1], tm_max=512))
    assert outb.shape == (300, sizes[-1])
    assert jnp.allclose(outb, refb, atol=1e-5, rtol=1e-5), "tiled-batch kernel mismatch"

    # bf16 path at the larger batch too (16-row sublane tiles, 2 parallel tiles).
    outb_bf16 = jax.block_until_ready(
        mlp_forward(pp_bf16, xb, out_features=sizes[-1], tm_max=512))
    assert jnp.allclose(outb_bf16, refb, atol=1e-1, rtol=1e-1), "bf16 tiled-batch mismatch"

    print("KERNEL_OK")
</pallas_src>

<mosaic_0001>
module attributes {stable_mosaic.version = 11 : i64} {
  func.func @_mlp_kernel(%arg0: i32, %arg1: memref<8x128xf32, #tpu.memory_space<vmem>>, %arg2: memref<128x128xf32, #tpu.memory_space<vmem>>, %arg3: memref<1x128xf32, #tpu.memory_space<vmem>>, %arg4: memref<128x128xf32, #tpu.memory_space<vmem>>, %arg5: memref<1x128xf32, #tpu.memory_space<vmem>>, %arg6: memref<128x128xf32, #tpu.memory_space<vmem>>, %arg7: memref<1x128xf32, #tpu.memory_space<vmem>>, %arg8: memref<8x128xf32, #tpu.memory_space<vmem>>) attributes {dimension_semantics = [#tpu.dimension_semantics<parallel>], iteration_bounds = array<i64: 1>, scalar_prefetch = 0 : i64, scratch_operands = 0 : i64, tpu.core_type = #tpu.core_type<tc>, window_params = [{transform_indices = @transform_0, window_bounds = array<i64: 8, 128>}, {pipeline_mode = #tpu.pipeline_mode<synchronous>, transform_indices = @transform_1, window_bounds = array<i64: 128, 128>}, {pipeline_mode = #tpu.pipeline_mode<synchronous>, transform_indices = @transform_2, window_bounds = array<i64: 1, 128>}, {pipeline_mode = #tpu.pipeline_mode<synchronous>, transform_indices = @transform_3, window_bounds = array<i64: 128, 128>}, {pipeline_mode = #tpu.pipeline_mode<synchronous>, transform_indices = @transform_4, window_bounds = array<i64: 1, 128>}, {pipeline_mode = #tpu.pipeline_mode<synchronous>, transform_indices = @transform_5, window_bounds = array<i64: 128, 128>}, {pipeline_mode = #tpu.pipeline_mode<synchronous>, transform_indices = @transform_6, window_bounds = array<i64: 1, 128>}, {transform_indices = @transform_7, window_bounds = array<i64: 8, 128>}]} {
    %c0 = arith.constant 0 : index
    %c0_0 = arith.constant 0 : index
    %0 = vector.load %arg1[%c0, %c0_0] : memref<8x128xf32, #tpu.memory_space<vmem>>, vector<8x128xf32>
    %c0_1 = arith.constant 0 : index
    %c0_2 = arith.constant 0 : index
    %1 = vector.load %arg2[%c0_1, %c0_2] : memref<128x128xf32, #tpu.memory_space<vmem>>, vector<128x128xf32>
    %cst = arith.constant dense<0.000000e+00> : vector<8x128xf32>
    %2 = tpu.matmul %0, %1, %cst {dimension_numbers = #tpu.dot_dimension_numbers<[1], [0], [0], [1], [0, 0, 1, 1], [], []>} : vector<8x128xf32>, vector<128x128xf32>, vector<8x128xf32> -> vector<8x128xf32>
    %c0_3 = arith.constant 0 : index
    %c0_4 = arith.constant 0 : index
    %3 = vector.load %arg3[%c0_3, %c0_4] : memref<1x128xf32, #tpu.memory_space<vmem>>, vector<1x128xf32>
    %4 = vector.broadcast %3 : vector<1x128xf32> to vector<8x128xf32>
    %5 = arith.addf %2, %4 : vector<8x128xf32>
    %6 = math.tanh %5 : vector<8x128xf32>
    %c0_5 = arith.constant 0 : index
    %c0_6 = arith.constant 0 : index
    %7 = vector.load %arg4[%c0_5, %c0_6] : memref<128x128xf32, #tpu.memory_space<vmem>>, vector<128x128xf32>
    %cst_7 = arith.constant dense<0.000000e+00> : vector<8x128xf32>
    %8 = tpu.matmul %6, %7, %cst_7 {dimension_numbers = #tpu.dot_dimension_numbers<[1], [0], [0], [1], [0, 0, 1, 1], [], []>} : vector<8x128xf32>, vector<128x128xf32>, vector<8x128xf32> -> vector<8x128xf32>
    %c0_8 = arith.constant 0 : index
    %c0_9 = arith.constant 0 : index
    %9 = vector.load %arg5[%c0_8, %c0_9] : memref<1x128xf32, #tpu.memory_space<vmem>>, vector<1x128xf32>
    %10 = vector.broadcast %9 : vector<1x128xf32> to vector<8x128xf32>
    %11 = arith.addf %8, %10 : vector<8x128xf32>
    %12 = math.tanh %11 : vector<8x128xf32>
    %c0_10 = arith.constant 0 : index
    %c0_11 = arith.constant 0 : index
    %13 = vector.load %arg6[%c0_10, %c0_11] : memref<128x128xf32, #tpu.memory_space<vmem>>, vector<128x128xf32>
    %cst_12 = arith.constant dense<0.000000e+00> : vector<8x128xf32>
    %14 = tpu.matmul %12, %13, %cst_12 {dimension_numbers = #tpu.dot_dimension_numbers<[1], [0], [0], [1], [0, 0, 1, 1], [], []>} : vector<8x128xf32>, vector<128x128xf32>, vector<8x128xf32> -> vector<8x128xf32>
    %c0_13 = arith.constant 0 : index
    %c0_14 = arith.constant 0 : index
    %15 = vector.load %arg7[%c0_13, %c0_14] : memref<1x128xf32, #tpu.memory_space<vmem>>, vector<1x128xf32>
    %16 = vector.broadcast %15 : vector<1x128xf32> to vector<8x128xf32>
    %17 = arith.addf %14, %16 : vector<8x128xf32>
    %c0_15 = arith.constant 0 : index
    %c0_16 = arith.constant 0 : index
    %18 = vector.load %arg8[%c0_15, %c0_16] : memref<8x128xf32, #tpu.memory_space<vmem>>, vector<8x128xf32>
    tpu.vector_store %arg8[%c0_15, %c0_16], %17 {strides = array<i32>} : memref<8x128xf32, #tpu.memory_space<vmem>>, vector<8x128xf32>,
    return
  }
  func.func @transform_0(%arg0: i32) -> (i32, i32) {
    %c0_i32 = arith.constant 0 : i32
    %c0_i32_0 = arith.constant 0 : i32
    return %arg0, %c0_i32 : i32, i32
  }
  func.func @transform_1(%arg0: i32) -> (i32, i32) {
    %c0_i32 = arith.constant 0 : i32
    %c0_i32_0 = arith.constant 0 : i32
    %c0_i32_1 = arith.constant 0 : i32
    return %c0_i32, %c0_i32_0 : i32, i32
  }
  func.func @transform_2(%arg0: i32) -> (i32, i32) {
    %c0_i32 = arith.constant 0 : i32
    %c0_i32_0 = arith.constant 0 : i32
    %c0_i32_1 = arith.constant 0 : i32
    return %c0_i32, %c0_i32_0 : i32, i32
  }
  func.func @transform_3(%arg0: i32) -> (i32, i32) {
    %c0_i32 = arith.constant 0 : i32
    %c0_i32_0 = arith.constant 0 : i32
    %c0_i32_1 = arith.constant 0 : i32
    return %c0_i32, %c0_i32_0 : i32, i32
  }
  func.func @transform_4(%arg0: i32) -> (i32, i32) {
    %c0_i32 = arith.constant 0 : i32
    %c0_i32_0 = arith.constant 0 : i32
    %c0_i32_1 = arith.constant 0 : i32
    return %c0_i32, %c0_i32_0 : i32, i32
  }
  func.func @transform_5(%arg0: i32) -> (i32, i32) {
    %c0_i32 = arith.constant 0 : i32
    %c0_i32_0 = arith.constant 0 : i32
    %c0_i32_1 = arith.constant 0 : i32
    return %c0_i32, %c0_i32_0 : i32, i32
  }
  func.func @transform_6(%arg0: i32) -> (i32, i32) {
    %c0_i32 = arith.constant 0 : i32
    %c0_i32_0 = arith.constant 0 : i32
    %c0_i32_1 = arith.constant 0 : i32
    return %c0_i32, %c0_i32_0 : i32, i32
  }
  func.func @transform_7(%arg0: i32) -> (i32, i32) {
    %c0_i32 = arith.constant 0 : i32
    %c0_i32_0 = arith.constant 0 : i32
    return %arg0, %c0_i32 : i32, i32
  }
}

</mosaic_0001>

<llo_original>
// kernel: mlp_forward.1
$region0: #{mlp_forward.1}
  #allocation0 [shape = 'u32[]', space=smem, size = 0x4, offset = 0x4, fixed_abs, tag = 'smem constant byte address 0x4 - core index']
  #allocation1 [shape = 'u32[72,128]{1,0:T(1,128)}', space=vmem, size = 0x9000, scoped, tag = 'internal scratch']
  %s0 = inlined_call_operand.vmem [shape: f32[8,128], index: 0, kind: input, shape index: {}]
  %s1 = inlined_call_operand.hbm [shape: f32[128,128], index: 1, kind: input, shape index: {}]
  %s2 = inlined_call_operand.vmem [shape: f32[1,128], index: 2, kind: input, shape index: {}]
  %s3 = inlined_call_operand.hbm [shape: f32[128,128], index: 3, kind: input, shape index: {}]
  %s4 = inlined_call_operand.vmem [shape: f32[1,128], index: 4, kind: input, shape index: {}]
  %s5 = inlined_call_operand.hbm [shape: f32[128,128], index: 5, kind: input, shape index: {}]
  %s6 = inlined_call_operand.vmem [shape: f32[1,128], index: 6, kind: input, shape index: {}]
  %s7 = inlined_call_operand.hbm [shape: f32[8,128], index: 7, kind: output, shape index: {}]
  %s8 = sld [smem:[#allocation0]]
  $region50: #{mlp_forward.1} parent=0
    _
  %s10 = ssub.s32 1, %s8
  %s11 = scalar_select 0, %s10, %s8
  $region1: #{mlp_forward.1} parent=0
    #allocation2 [shape = 'u8[65536]{0}', space=vmem, size = 0x10000, scoped, tag = 'input window, operand 1, single buffered']
    #allocation3 [shape = 's32[1]{0}', space=sflag, size = 0x4, scoped, tag = 'scoped memory for mlp_forward.1']
    #allocation4 [shape = 's32[1]{0}', space=sflag, size = 0x4, scoped, tag = 'scoped memory for mlp_forward.1']
    #allocation5 [shape = 'u8[65536]{0}', space=vmem, size = 0x10000, scoped, tag = 'input window, operand 3, single buffered']
    #allocation6 [shape = 's32[1]{0}', space=sflag, size = 0x4, scoped, tag = 'scoped memory for mlp_forward.1']
    #allocation7 [shape = 'u8[65536]{0}', space=vmem, size = 0x10000, scoped, tag = 'input window, operand 5, single buffered']
    #allocation8 [shape = 'u8[4096]{0}', space=vmem, size = 0x1000, scoped, tag = 'output window, operand 0, single buffered']
    %12 = vsyncpa [#allocation3], 0
    %13 = vsyncpa [#allocation6], 0
    %14 = vsyncpa [#allocation4], 0
    // Predicated region
    $region2: #{mlp_forward.1} parent=1 // pred_check
      _
    $region3: #{mlp_forward.1} parent=1 // pred_check_branch
      %16 = sbr.rel (0) target = $region5
    $region4: #{mlp_forward.1} parent=1 // pred_region
      _
    $region5: #{mlp_forward.1} parent=1 // pred_fallthru
      _
    // Predicated region
    $region6: #{mlp_forward.1} parent=1 // pred_check
      _
    $region7: #{mlp_forward.1} parent=1 // pred_check_branch
      %18 = sbr.rel (0) target = $region9
    $region8: #{mlp_forward.1} parent=1 // pred_region
      %20 = vsyncadd [#allocation3], 0
      %s21 = sshll.u32 %s1, 4
      %s22 = int_to_ptr.hbm [resolvable:$true] %s21
      %s23 = sshll.u32 [#allocation2], 4
      %s24 = int_to_ptr.vmem [resolvable:$true] %s23
      %29 = dma.hbm_to_vmem [thread:$0]  %s22, 2048, %s24, [#allocation3], 128, 128, 8
    $region9: #{mlp_forward.1} parent=1 // pred_fallthru
      _
    // Predicated region
    $region10: #{mlp_forward.1} parent=1 // pred_check
      _
    $region11: #{mlp_forward.1} parent=1 // pred_check_branch
      %31 = sbr.rel (0) target = $region13
    $region12: #{mlp_forward.1} parent=1 // pred_region
      _
    $region13: #{mlp_forward.1} parent=1 // pred_fallthru
      _
    // Predicated region
    $region14: #{mlp_forward.1} parent=1 // pred_check
      _
    $region15: #{mlp_forward.1} parent=1 // pred_check_branch
      %33 = sbr.rel (0) target = $region17
    $region16: #{mlp_forward.1} parent=1 // pred_region
      %35 = vsyncadd [#allocation6], 0
      %s36 = sshll.u32 %s3, 4
      %s37 = int_to_ptr.hbm [resolvable:$true] %s36
      %s38 = sshll.u32 [#allocation5], 4
      %s39 = int_to_ptr.vmem [resolvable:$true] %s38
      %44 = dma.hbm_to_vmem [thread:$0]  %s37, 2048, %s39, [#allocation6], 128, 128, 8
    $region17: #{mlp_forward.1} parent=1 // pred_fallthru
      _
    // Predicated region
    $region18: #{mlp_forward.1} parent=1 // pred_check
      _
    $region19: #{mlp_forward.1} parent=1 // pred_check_branch
      %46 = sbr.rel (0) target = $region21
    $region20: #{mlp_forward.1} parent=1 // pred_region
      _
    $region21: #{mlp_forward.1} parent=1 // pred_fallthru
      _
    // Predicated region
    $region22: #{mlp_forward.1} parent=1 // pred_check
      _
    $region23: #{mlp_forward.1} parent=1 // pred_check_branch
      %48 = sbr.rel (0) target = $region25
    $region24: #{mlp_forward.1} parent=1 // pred_region
      %50 = vsyncadd [#allocation6], 0
      %s51 = sshll.u32 %s5, 4
      %s52 = int_to_ptr.hbm [resolvable:$true] %s51
      %s53 = sshll.u32 [#allocation7], 4
      %s54 = int_to_ptr.vmem [resolvable:$true] %s53
      %59 = dma.hbm_to_vmem [thread:$0]  %s52, 2048, %s54, [#allocation6], 128, 128, 8
    $region25: #{mlp_forward.1} parent=1 // pred_fallthru
      _
    // Predicated region
    $region26: #{mlp_forward.1} parent=1 // pred_check
      _
    $region27: #{mlp_forward.1} parent=1 // pred_check_branch
      %61 = sbr.rel (0) target = $region29
    $region28: #{mlp_forward.1} parent=1 // pred_region
      _
    $region29: #{mlp_forward.1} parent=1 // pred_fallthru
      _
    // Predicated region
    $region30: #{mlp_forward.1} parent=1 // pred_check
      _
    $region31: #{mlp_forward.1} parent=1 // pred_check_branch
      %63 = sbr.rel (0) target = $region33
    $region32: #{mlp_forward.1} parent=1 // pred_region
      %65 = dma.done [#allocation3], 2048
    $region33: #{mlp_forward.1} parent=1 // pred_fallthru
      _
    // Predicated region
    $region34: #{mlp_forward.1} parent=1 // pred_check
      _
    $region35: #{mlp_forward.1} parent=1 // pred_check_branch
      %67 = sbr.rel (0) target = $region37
    $region36: #{mlp_forward.1} parent=1 // pred_region
      %69 = dma.done [#allocation6], 2048
    $region37: #{mlp_forward.1} parent=1 // pred_fallthru
      _
    // Predicated region
    $region38: #{mlp_forward.1} parent=1 // pred_check
      _
    $region39: #{mlp_forward.1} parent=1 // pred_check_branch
      %71 = sbr.rel (0) target = $region41
    $region40: #{mlp_forward.1} parent=1 // pred_region
      %73 = dma.done [#allocation6], 2048
    $region41: #{mlp_forward.1} parent=1 // pred_fallthru
      _
    %v74 = vld [vmem:[%s0] sm:$0xff]
    %v75 = vld [vmem:[#allocation2] sm:$0xff]
    %v76 = vld [vmem:[#allocation2 + $0x8] sm:$0xff]
    %v77 = vld [vmem:[#allocation2 + $0x10] sm:$0xff]
    %v78 = vld [vmem:[#allocation2 + $0x18] sm:$0xff]
    %v79 = vld [vmem:[#allocation2 + $0x20] sm:$0xff]
    %v80 = vld [vmem:[#allocation2 + $0x28] sm:$0xff]
    %v81 = vld [vmem:[#allocation2 + $0x30] sm:$0xff]
    %v82 = vld [vmem:[#allocation2 + $0x38] sm:$0xff]
    %v83 = vld [vmem:[#allocation2 + $0x40] sm:$0xff]
    %v84 = vld [vmem:[#allocation2 + $0x48] sm:$0xff]
    %v85 = vld [vmem:[#allocation2 + $0x50] sm:$0xff]
    %v86 = vld [vmem:[#allocation2 + $0x58] sm:$0xff]
    %v87 = vld [vmem:[#allocation2 + $0x60] sm:$0xff]
    %v88 = vld [vmem:[#allocation2 + $0x68] sm:$0xff]
    %v89 = vld [vmem:[#allocation2 + $0x70] sm:$0xff]
    %v90 = vld [vmem:[#allocation2 + $0x78] sm:$0xff]
    %v91 = vld [vmem:[%s2] sm:$0x1]
    %v93 = vperm.slane %v91, 0
    %95 = vmatpush.msra.mxu0 %v90
    %96 = vmatpush.msra.mxu0 %v89
    %97 = vmatpush.msra.mxu0 %v88
    %98 = vmatpush.msra.mxu0 %v87
    %99 = vmatpush.msra.mxu0 %v86
    %100 = vmatpush.msra.mxu0 %v85
    %101 = vmatpush.msra.mxu0 %v84
    %102 = vmatpush.msra.mxu0 %v83
    %103 = vmatpush.msra.mxu0 %v82
    %104 = vmatpush.msra.mxu0 %v81
    %105 = vmatpush.msra.mxu0 %v80
    %106 = vmatpush.msra.mxu0 %v79
    %107 = vmatpush.msra.mxu0 %v78
    %108 = vmatpush.msra.mxu0 %v77
    %109 = vmatpush.msra.mxu0 %v76
    %110 = vmatpush.msra.mxu0 %v75
    %111 = vmatmul.f32.gmra.mxu0 %v74
    %v112 = vpop.f32.mrf.mxu0
    %v113 = vadd.f32 %v93, %v112
    %114 = vdwg.mxu0
    %v115 = vtanh.pop %v113
    %v116 = vld [vmem:[#allocation5] sm:$0xff]
    %v117 = vld [vmem:[#allocation5 + $0x8] sm:$0xff]
    %v118 = vld [vmem:[#allocation5 + $0x10] sm:$0xff]
    %v119 = vld [vmem:[#allocation5 + $0x18] sm:$0xff]
    %v120 = vld [vmem:[#allocation5 + $0x20] sm:$0xff]
    %v121 = vld [vmem:[#allocation5 + $0x28] sm:$0xff]
    %v122 = vld [vmem:[#allocation5 + $0x30] sm:$0xff]
    %v123 = vld [vmem:[#allocation5 + $0x38] sm:$0xff]
    %v124 = vld [vmem:[#allocation5 + $0x40] sm:$0xff]
    %v125 = vld [vmem:[#allocation5 + $0x48] sm:$0xff]
    %v126 = vld [vmem:[#allocation5 + $0x50] sm:$0xff]
    %v127 = vld [vmem:[#allocation5 + $0x58] sm:$0xff]
    %v128 = vld [vmem:[#allocation5 + $0x60] sm:$0xff]
    %v129 = vld [vmem:[#allocation5 + $0x68] sm:$0xff]
    %v130 = vld [vmem:[#allocation5 + $0x70] sm:$0xff]
    %v131 = vld [vmem:[#allocation5 + $0x78] sm:$0xff]
    %v132 = vld [vmem:[%s4] sm:$0x1]
    %v134 = vperm.slane %v132, 0
    %136 = vmatpush.msra.mxu0 %v131
    %137 = vmatpush.msra.mxu0 %v130
    %138 = vmatpush.msra.mxu0 %v129
    %139 = vmatpush.msra.mxu0 %v128
    %140 = vmatpush.msra.mxu0 %v127
    %141 = vmatpush.msra.mxu0 %v126
    %142 = vmatpush.msra.mxu0 %v125
    %143 = vmatpush.msra.mxu0 %v124
    %144 = vmatpush.msra.mxu0 %v123
    %145 = vmatpush.msra.mxu0 %v122
    %146 = vmatpush.msra.mxu0 %v121
    %147 = vmatpush.msra.mxu0 %v120
    %148 = vmatpush.msra.mxu0 %v119
    %149 = vmatpush.msra.mxu0 %v118
    %150 = vmatpush.msra.mxu0 %v117
    %151 = vmatpush.msra.mxu0 %v116
    %152 = vmatmul.f32.gmra.mxu0 %v115
    %v153 = vpop.f32.mrf.mxu0
    %v154 = vadd.f32 %v134, %v153
    %155 = vdwg.mxu0
    %v156 = vtanh.pop %v154
    %v157 = vld [vmem:[#allocation7] sm:$0xff]
    %v158 = vld [vmem:[#allocation7 + $0x8] sm:$0xff]
    %v159 = vld [vmem:[#allocation7 + $0x10] sm:$0xff]
    %v160 = vld [vmem:[#allocation7 + $0x18] sm:$0xff]
    %v161 = vld [vmem:[#allocation7 + $0x20] sm:$0xff]
    %v162 = vld [vmem:[#allocation7 + $0x28] sm:$0xff]
    %v163 = vld [vmem:[#allocation7 + $0x30] sm:$0xff]
    %v164 = vld [vmem:[#allocation7 + $0x38] sm:$0xff]
    %v165 = vld [vmem:[#allocation7 + $0x40] sm:$0xff]
    %v166 = vld [vmem:[#allocation7 + $0x48] sm:$0xff]
    %v167 = vld [vmem:[#allocation7 + $0x50] sm:$0xff]
    %v168 = vld [vmem:[#allocation7 + $0x58] sm:$0xff]
    %v169 = vld [vmem:[#allocation7 + $0x60] sm:$0xff]
    %v170 = vld [vmem:[#allocation7 + $0x68] sm:$0xff]
    %v171 = vld [vmem:[#allocation7 + $0x70] sm:$0xff]
    %v172 = vld [vmem:[#allocation7 + $0x78] sm:$0xff]
    %v173 = vld [vmem:[%s6] sm:$0x1]
    %v175 = vperm.slane %v173, 0
    %177 = vmatpush.msra.mxu0 %v172
    %178 = vmatpush.msra.mxu0 %v171
    %179 = vmatpush.msra.mxu0 %v170
    %180 = vmatpush.msra.mxu0 %v169
    %181 = vmatpush.msra.mxu0 %v168
    %182 = vmatpush.msra.mxu0 %v167
    %183 = vmatpush.msra.mxu0 %v166
    %184 = vmatpush.msra.mxu0 %v165
    %185 = vmatpush.msra.mxu0 %v164
    %186 = vmatpush.msra.mxu0 %v163
    %187 = vmatpush.msra.mxu0 %v162
    %188 = vmatpush.msra.mxu0 %v161
    %189 = vmatpush.msra.mxu0 %v160
    %190 = vmatpush.msra.mxu0 %v159
    %191 = vmatpush.msra.mxu0 %v158
    %192 = vmatpush.msra.mxu0 %v157
    %193 = vmatmul.f32.gmra.mxu0 %v156
    %v194 = vpop.f32.mrf.mxu0
    %v195 = vadd.f32 %v175, %v194
    %196 = vdwg.mxu0
    %197 = vst [vmem:[#allocation8] sm:$0xff] %v195
    // Predicated region
    $region42: #{mlp_forward.1} parent=1 // pred_check
      _
    $region43: #{mlp_forward.1} parent=1 // pred_check_branch
      %199 = sbr.rel (0) target = $region45
    $region44: #{mlp_forward.1} parent=1 // pred_region
      %201 = vsyncadd [#allocation4], 0
      %s203 = sshll.u32 [#allocation8], 4
      %s204 = int_to_ptr.vmem [resolvable:$true] %s203
      %s205 = sshll.u32 %s7, 4
      %s206 = int_to_ptr.hbm [resolvable:$true] %s205
      %208 = dma.vmem_to_hbm [thread:$0]  %s204, 128, %s206, [#allocation4]
    $region45: #{mlp_forward.1} parent=1 // pred_fallthru
      _
    // Predicated region
    $region46: #{mlp_forward.1} parent=1 // pred_check
      _
    $region47: #{mlp_forward.1} parent=1 // pred_check_branch
      %210 = sbr.rel (0) target = $region49
    $region48: #{mlp_forward.1} parent=1 // pred_region
      %212 = dma.done [#allocation4], 128
    $region49: #{mlp_forward.1} parent=1 // pred_fallthru
      _
    %213 = vsyncpa [#allocation3], 1
    %214 = vsyncpa [#allocation6], 1
    %215 = vsyncpa [#allocation4], 1

</llo_original>
